<compile_context>
chip_gen: v5e
topology: v5e:2x2
jax: 0.10.0
libtpu: 0.0.40
codegen_flags: <defaults>
</compile_context>

<pallas_src>
import functools

import jax
import jax.numpy as jnp
from jax.experimental import pallas as pl
from jax.experimental.pallas import tpu as pltpu

QB = 8  # query-row block: single query replicated -> sublane-aligned LHS/output


def _round_up(x, n):
    return (x + n - 1) // n * n


def _sha_kernel(q_ref, k_ref, v_ref, o_ref, m_scr, l_scr, acc_scr,
                *, m_total, tile_m, need_mask):
    i = pl.program_id(0)

    @pl.when(i == 0)
    def _init():
        m_scr[...] = jnp.full_like(m_scr, -jnp.inf)
        l_scr[...] = jnp.zeros_like(l_scr)
        acc_scr[...] = jnp.zeros_like(acc_scr)

    # logits tile: (QB, tile_m) = q (QB, k) · K_tile (tile_m, k), contracting k
    # on both operands directly — no materialized K^T in the kernel.
    logits = jax.lax.dot_general(
        q_ref[...], k_ref[...],
        dimension_numbers=(((1,), (1,)), ((), ())),
        preferred_element_type=jnp.float32)

    if need_mask:  # mask the zero-padded m rows of the (last) tile
        col = jax.lax.broadcasted_iota(jnp.int32, logits.shape, 1) + i * tile_m
        logits = jnp.where(col < m_total, logits, jnp.float32(-1e30))

    # Online (flash-style) softmax accumulation across m tiles.
    m_prev = m_scr[...]
    m_new = jnp.maximum(m_prev, jnp.max(logits, axis=-1, keepdims=True))
    alpha = jnp.exp(m_prev - m_new)
    p = jnp.exp(logits - m_new)
    l_scr[...] = alpha * l_scr[...] + jnp.sum(p, axis=-1, keepdims=True)
    acc_scr[...] = alpha * acc_scr[...] + jnp.dot(
        p.astype(v_ref.dtype), v_ref[...], preferred_element_type=jnp.float32)
    m_scr[...] = m_new

    @pl.when(i == pl.num_programs(0) - 1)
    def _finalize():
        # Normalize once at the end. (approx=True would push this onto the
        # otherwise-idle EUP slot; exact f32 keeps the correctness check tight
        # and costs nothing since it runs once per call on an (8, v) tile.)
        inv_l = pl.reciprocal(l_scr[...], approx=False)
        o_ref[...] = (acc_scr[...] * inv_l).astype(o_ref.dtype)


def _pick_tile_m(m, k_pad, v_pad, itemsize):
    # K and V tiles are each double-buffered by the Pallas pipeline:
    # footprint ≈ 2 * tile_m * (k_pad + v_pad) * itemsize.  Budget ~8 MiB so it
    # fits every generation's scoped-VMEM default with headroom.
    budget = 8 * 1024 * 1024
    per_row = 2 * (k_pad + v_pad) * itemsize
    t = max(16, budget // per_row)
    t = min(t, 4096)                 # plenty to amortize per-step grid overhead
    t = min(t, _round_up(m, 16))     # don't exceed (padded) m
    return int(_round_up(t, 16))     # sublane-aligned for f32 and bf16


def sha(q, K, V, *, tile_m=None):
    """q: [k], K: [m, k], V: [m, v] -> y: [v] == softmax(K @ q) @ V."""
    m, k = K.shape
    m2, v = V.shape
    assert m == m2 and q.shape == (k,)

    k_pad = _round_up(k, 128)   # lane-dense contraction dim
    v_pad = _round_up(v, 128)   # lane-dense output dim (unmasked stores)
    itemsize = jnp.dtype(V.dtype).itemsize
    if tile_m is None:
        tile_m = _pick_tile_m(m, k_pad, v_pad, itemsize)
    m_pad = _round_up(m, tile_m)
    grid_m = m_pad // tile_m

    # Zero-pad to aligned shapes. Zero k-padding contributes nothing to the
    # logits; padded m rows are masked inside the kernel.
    qp = jnp.zeros((QB, k_pad), dtype=q.dtype).at[:, :k].set(
        jnp.broadcast_to(q[None, :], (QB, k)))
    Kp = jnp.zeros((m_pad, k_pad), dtype=K.dtype).at[:m, :k].set(K)
    Vp = jnp.zeros((m_pad, v_pad), dtype=V.dtype).at[:m, :v].set(V)

    kernel = functools.partial(_sha_kernel, m_total=m, tile_m=tile_m,
                               need_mask=(m_pad != m))

    out = pl.pallas_call(
        kernel,
        out_shape=jax.ShapeDtypeStruct((QB, v_pad), V.dtype),
        grid=(grid_m,),
        in_specs=[
            pl.BlockSpec((QB, k_pad), lambda i: (0, 0)),       # q: resident
            pl.BlockSpec((tile_m, k_pad), lambda i: (i, 0)),   # K: streamed over m
            pl.BlockSpec((tile_m, v_pad), lambda i: (i, 0)),   # V: streamed over m
        ],
        out_specs=pl.BlockSpec((QB, v_pad), lambda i: (0, 0)),  # written at finalize
        scratch_shapes=[
            pltpu.VMEM((QB, 1), jnp.float32),      # running max
            pltpu.VMEM((QB, 1), jnp.float32),      # running softmax denominator
            pltpu.VMEM((QB, v_pad), jnp.float32),  # running weighted-V accumulator
        ],
        compiler_params=pltpu.CompilerParams(
            dimension_semantics=("arbitrary",),    # m is a reduction axis
        ),
    )(qp, Kp, Vp)

    # TODO(synk): for many queries/heads, add a leading "parallel" grid axis so
    # K/V are read from HBM once per block of queries (and megacore on v7x).
    return out[0, :v]


if __name__ == "__main__":
    key = jax.random.PRNGKey(0)
    kq, kK, kV = jax.random.split(key, 3)
    m, k, v = 300, 32, 64  # small; m not a multiple of the tile -> masking path
    q = jax.random.normal(kq, (k,), dtype=jnp.float32)
    K = jax.random.normal(kK, (m, k), dtype=jnp.float32)
    V = jax.random.normal(kV, (m, v), dtype=jnp.float32)

    y_ref = jax.nn.softmax(K @ q) @ V

    # Multi-tile path: grid over m (3 steps), online softmax, masked last tile.
    y = jax.block_until_ready(sha(q, K, V, tile_m=128))
    assert y.shape == (v,)
    assert jnp.allclose(y, y_ref, atol=1e-4, rtol=1e-4), "mismatch (tiled path)"

    # Auto tile-size path.
    y2 = jax.block_until_ready(sha(q, K, V))
    assert jnp.allclose(y2, y_ref, atol=1e-4, rtol=1e-4), "mismatch (auto tile)"

    print("KERNEL_OK")
</pallas_src>

<mosaic_0001>
module attributes {stable_mosaic.version = 11 : i64} {
  func.func @_sha_kernel(%arg0: i32, %arg1: memref<8x128xf32, #tpu.memory_space<vmem>>, %arg2: memref<128x128xf32, #tpu.memory_space<vmem>>, %arg3: memref<128x128xf32, #tpu.memory_space<vmem>>, %arg4: memref<8x128xf32, #tpu.memory_space<vmem>>, %arg5: memref<8x1xf32, #tpu.memory_space<vmem>>, %arg6: memref<8x1xf32, #tpu.memory_space<vmem>>, %arg7: memref<8x128xf32, #tpu.memory_space<vmem>>) attributes {dimension_semantics = [#tpu.dimension_semantics<arbitrary>], iteration_bounds = array<i64: 3>, scalar_prefetch = 0 : i64, scratch_operands = 3 : i64, tpu.core_type = #tpu.core_type<tc>, window_params = [{pipeline_mode = #tpu.pipeline_mode<synchronous>, transform_indices = @transform_0, window_bounds = array<i64: 8, 128>}, {transform_indices = @transform_1, window_bounds = array<i64: 128, 128>}, {transform_indices = @transform_2, window_bounds = array<i64: 128, 128>}, {pipeline_mode = #tpu.pipeline_mode<synchronous>, transform_indices = @transform_3, window_bounds = array<i64: 8, 128>}]} {
    %c0_i32 = arith.constant 0 : i32
    %0 = arith.cmpi eq, %arg0, %c0_i32 : i32
    %1 = arith.extui %0 : i1 to i32
    %c0_i32_0 = arith.constant 0 : i32
    %2 = arith.cmpi ne, %1, %c0_i32_0 : i32
    scf.if %2 {
      %cst_23 = arith.constant 0xFF800000 : f32
      %40 = vector.broadcast %cst_23 : f32 to vector<8x1xf32>
      %c0_24 = arith.constant 0 : index
      %c0_25 = arith.constant 0 : index
      %41 = vector.load %arg5[%c0_24, %c0_25] : memref<8x1xf32, #tpu.memory_space<vmem>>, vector<8x1xf32>
      tpu.vector_store %arg5[%c0_24, %c0_25], %40 {strides = array<i32>} : memref<8x1xf32, #tpu.memory_space<vmem>>, vector<8x1xf32>,
      %cst_26 = arith.constant 0.000000e+00 : f32
      %42 = vector.broadcast %cst_26 : f32 to vector<8x1xf32>
      %c0_27 = arith.constant 0 : index
      %c0_28 = arith.constant 0 : index
      %43 = vector.load %arg6[%c0_27, %c0_28] : memref<8x1xf32, #tpu.memory_space<vmem>>, vector<8x1xf32>
      tpu.vector_store %arg6[%c0_27, %c0_28], %42 {strides = array<i32>} : memref<8x1xf32, #tpu.memory_space<vmem>>, vector<8x1xf32>,
      %cst_29 = arith.constant 0.000000e+00 : f32
      %44 = vector.broadcast %cst_29 : f32 to vector<8x128xf32>
      %c0_30 = arith.constant 0 : index
      %c0_31 = arith.constant 0 : index
      %45 = vector.load %arg7[%c0_30, %c0_31] : memref<8x128xf32, #tpu.memory_space<vmem>>, vector<8x128xf32>
      tpu.vector_store %arg7[%c0_30, %c0_31], %44 {strides = array<i32>} : memref<8x128xf32, #tpu.memory_space<vmem>>, vector<8x128xf32>,
    } else {
    }
    %c0 = arith.constant 0 : index
    %c0_1 = arith.constant 0 : index
    %3 = vector.load %arg1[%c0, %c0_1] : memref<8x128xf32, #tpu.memory_space<vmem>>, vector<8x128xf32>
    %c0_2 = arith.constant 0 : index
    %c0_3 = arith.constant 0 : index
    %4 = vector.load %arg2[%c0_2, %c0_3] : memref<128x128xf32, #tpu.memory_space<vmem>>, vector<128x128xf32>
    %cst = arith.constant dense<0.000000e+00> : vector<8x128xf32>
    %5 = tpu.matmul %3, %4, %cst {dimension_numbers = #tpu.dot_dimension_numbers<[1], [1], [0], [0], [0, 0, 1, 0], [], []>} : vector<8x128xf32>, vector<128x128xf32>, vector<8x128xf32> -> vector<8x128xf32>
    %6 = tpu.iota {dimensions = array<i32: 1>} : vector<8x128xi32>
    %c128_i32 = arith.constant 128 : i32
    %7 = arith.muli %arg0, %c128_i32 : i32
    %8 = vector.broadcast %7 : i32 to vector<8x128xi32>
    %9 = arith.addi %6, %8 : vector<8x128xi32>
    %c300_i32 = arith.constant 300 : i32
    %10 = vector.broadcast %c300_i32 : i32 to vector<8x128xi32>
    %11 = arith.cmpi slt, %9, %10 : vector<8x128xi32>
    %cst_4 = arith.constant -1.000000e+30 : f32
    %12 = vector.broadcast %cst_4 : f32 to vector<8x128xf32>
    %13 = arith.select %11, %5, %12 : vector<8x128xi1>, vector<8x128xf32>
    %c0_5 = arith.constant 0 : index
    %c0_6 = arith.constant 0 : index
    %14 = vector.load %arg5[%c0_5, %c0_6] : memref<8x1xf32, #tpu.memory_space<vmem>>, vector<8x1xf32>
    %cst_7 = arith.constant dense<0xFF800000> : vector<8xf32>
    %15 = vector.multi_reduction <maximumf>, %13, %cst_7 [1] : vector<8x128xf32> to vector<8xf32>
    %16 = vector.shape_cast %15 : vector<8xf32> to vector<8x1xf32>
    %17 = arith.maximumf %14, %16 : vector<8x1xf32>
    %18 = arith.subf %14, %17 : vector<8x1xf32>
    %19 = math.exp %18 : vector<8x1xf32>
    %20 = vector.broadcast %17 : vector<8x1xf32> to vector<8x128xf32>
    %21 = arith.subf %13, %20 : vector<8x128xf32>
    %22 = math.exp %21 : vector<8x128xf32>
    %c0_8 = arith.constant 0 : index
    %c0_9 = arith.constant 0 : index
    %23 = vector.load %arg6[%c0_8, %c0_9] : memref<8x1xf32, #tpu.memory_space<vmem>>, vector<8x1xf32>
    %24 = arith.mulf %19, %23 : vector<8x1xf32>
    %cst_10 = arith.constant dense<0.000000e+00> : vector<8xf32>
    %25 = vector.multi_reduction <add>, %22, %cst_10 [1] : vector<8x128xf32> to vector<8xf32>
    %26 = vector.shape_cast %25 : vector<8xf32> to vector<8x1xf32>
    %27 = arith.addf %24, %26 : vector<8x1xf32>
    %c0_11 = arith.constant 0 : index
    %c0_12 = arith.constant 0 : index
    %28 = vector.load %arg6[%c0_11, %c0_12] : memref<8x1xf32, #tpu.memory_space<vmem>>, vector<8x1xf32>
    tpu.vector_store %arg6[%c0_11, %c0_12], %27 {strides = array<i32>} : memref<8x1xf32, #tpu.memory_space<vmem>>, vector<8x1xf32>,
    %c0_13 = arith.constant 0 : index
    %c0_14 = arith.constant 0 : index
    %29 = vector.load %arg7[%c0_13, %c0_14] : memref<8x128xf32, #tpu.memory_space<vmem>>, vector<8x128xf32>
    %30 = vector.broadcast %19 : vector<8x1xf32> to vector<8x128xf32>
    %31 = arith.mulf %30, %29 : vector<8x128xf32>
    %c0_15 = arith.constant 0 : index
    %c0_16 = arith.constant 0 : index
    %32 = vector.load %arg3[%c0_15, %c0_16] : memref<128x128xf32, #tpu.memory_space<vmem>>, vector<128x128xf32>
    %cst_17 = arith.constant dense<0.000000e+00> : vector<8x128xf32>
    %33 = tpu.matmul %22, %32, %cst_17 {dimension_numbers = #tpu.dot_dimension_numbers<[1], [0], [0], [1], [0, 0, 1, 1], [], []>} : vector<8x128xf32>, vector<128x128xf32>, vector<8x128xf32> -> vector<8x128xf32>
    %34 = arith.addf %31, %33 : vector<8x128xf32>
    %c0_18 = arith.constant 0 : index
    %c0_19 = arith.constant 0 : index
    %35 = vector.load %arg7[%c0_18, %c0_19] : memref<8x128xf32, #tpu.memory_space<vmem>>, vector<8x128xf32>
    tpu.vector_store %arg7[%c0_18, %c0_19], %34 {strides = array<i32>} : memref<8x128xf32, #tpu.memory_space<vmem>>, vector<8x128xf32>,
    %c0_20 = arith.constant 0 : index
    %c0_21 = arith.constant 0 : index
    %36 = vector.load %arg5[%c0_20, %c0_21] : memref<8x1xf32, #tpu.memory_space<vmem>>, vector<8x1xf32>
    tpu.vector_store %arg5[%c0_20, %c0_21], %17 {strides = array<i32>} : memref<8x1xf32, #tpu.memory_space<vmem>>, vector<8x1xf32>,
    %c2_i32 = arith.constant 2 : i32
    %37 = arith.cmpi eq, %arg0, %c2_i32 : i32
    %38 = arith.extui %37 : i1 to i32
    %c0_i32_22 = arith.constant 0 : i32
    %39 = arith.cmpi ne, %38, %c0_i32_22 : i32
    scf.if %39 {
      %c0_23 = arith.constant 0 : index
      %c0_24 = arith.constant 0 : index
      %40 = vector.load %arg6[%c0_23, %c0_24] : memref<8x1xf32, #tpu.memory_space<vmem>>, vector<8x1xf32>
      %41 = tpu.reciprocal %40 : vector<8x1xf32> -> vector<8x1xf32>
      %c0_25 = arith.constant 0 : index
      %c0_26 = arith.constant 0 : index
      %42 = vector.load %arg7[%c0_25, %c0_26] : memref<8x128xf32, #tpu.memory_space<vmem>>, vector<8x128xf32>
      %43 = vector.broadcast %41 : vector<8x1xf32> to vector<8x128xf32>
      %44 = arith.mulf %42, %43 : vector<8x128xf32>
      %c0_27 = arith.constant 0 : index
      %c0_28 = arith.constant 0 : index
      %45 = vector.load %arg4[%c0_27, %c0_28] : memref<8x128xf32, #tpu.memory_space<vmem>>, vector<8x128xf32>
      tpu.vector_store %arg4[%c0_27, %c0_28], %44 {strides = array<i32>} : memref<8x128xf32, #tpu.memory_space<vmem>>, vector<8x128xf32>,
    } else {
    }
    return
  }
  func.func @transform_0(%arg0: i32) -> (i32, i32) {
    %c0_i32 = arith.constant 0 : i32
    %c0_i32_0 = arith.constant 0 : i32
    %c0_i32_1 = arith.constant 0 : i32
    return %c0_i32, %c0_i32_0 : i32, i32
  }
  func.func @transform_1(%arg0: i32) -> (i32, i32) {
    %c0_i32 = arith.constant 0 : i32
    %c0_i32_0 = arith.constant 0 : i32
    return %arg0, %c0_i32 : i32, i32
  }
  func.func @transform_2(%arg0: i32) -> (i32, i32) {
    %c0_i32 = arith.constant 0 : i32
    %c0_i32_0 = arith.constant 0 : i32
    return %arg0, %c0_i32 : i32, i32
  }
  func.func @transform_3(%arg0: i32) -> (i32, i32) {
    %c0_i32 = arith.constant 0 : i32
    %c0_i32_0 = arith.constant 0 : i32
    %c0_i32_1 = arith.constant 0 : i32
    return %c0_i32, %c0_i32_0 : i32, i32
  }
}

</mosaic_0001>

<llo_original>
// kernel: tpu_custom_call.1
$region0: #{tpu_custom_call.1}
  #allocation0 [shape = 'u32[]', space=smem, size = 0x4, offset = 0x4, fixed_abs, tag = 'smem constant byte address 0x4 - core index']
  #allocation1 [shape = 'u32[72,128]{1,0:T(1,128)}', space=vmem, size = 0x9000, scoped, tag = 'internal scratch']
  #allocation2 [shape = 'f32[8,1]{1,0:T(8,128)}', space=vmem, size = 0x1000, scoped, tag = 'scratch operand']
  #allocation3 [shape = 'f32[8,1]{1,0:T(8,128)}', space=vmem, size = 0x1000, scoped, tag = 'scratch operand']
  #allocation4 [shape = 'f32[8,128]{1,0:T(8,128)}', space=vmem, size = 0x1000, scoped, tag = 'scratch operand']
  %s0 = inlined_call_operand.hbm [shape: f32[8,128], index: 0, kind: input, shape index: {}]
  %s1 = inlined_call_operand.hbm [shape: f32[384,128], index: 1, kind: input, shape index: {}]
  %s2 = inlined_call_operand.hbm [shape: f32[384,128], index: 2, kind: input, shape index: {}]
  %s3 = inlined_call_operand.hbm [shape: f32[8,128], index: 3, kind: output, shape index: {}]
  %s4 = sld [smem:[#allocation0]]
  $region65: #{tpu_custom_call.1} parent=0
    _
  %s6 = ssub.s32 1, %s4
  %s7 = scalar_select 0, %s6, %s4
  $region1: #{tpu_custom_call.1} parent=0
    #allocation5 [shape = 'u8[4096]{0}', space=vmem, size = 0x1000, scoped, tag = 'input window, operand 0, single buffered']
    #allocation6 [shape = 's32[2]{0}', space=sflag, size = 0x8, scoped, tag = 'scoped memory for tpu_custom_call.1']
    #allocation7 [shape = 's32[2]{0}', space=sflag, size = 0x8, scoped, tag = 'scoped memory for tpu_custom_call.1']
    #allocation8 [shape = 'u8[131072]{0}', space=vmem, size = 0x20000, scoped, tag = 'input window, operand 1']
    #allocation9 [shape = 's32[2]{0}', space=sflag, size = 0x8, scoped, tag = 'scoped memory for tpu_custom_call.1']
    #allocation10 [shape = 'u8[131072]{0}', space=vmem, size = 0x20000, scoped, tag = 'input window, operand 2']
    #allocation11 [shape = 'u8[4096]{0}', space=vmem, size = 0x1000, scoped, tag = 'output window, operand 0, single buffered']
    %8 = vsyncpa [#allocation6], 0
    %9 = vsyncpa [#allocation9], 0
    %s10 = scalar_lea.sflag [#allocation9], 1
    %11 = vsyncpa %s10, 0
    %12 = vsyncpa [#allocation7], 0
    loop: start=0, step=1, limit=5
    $region2: #{tpu_custom_call.1} parent=1 // loop_pre_header
      _
    $region3: #{tpu_custom_call.1} parent=1 // loop_header
      %s14 = sphi 0, %s18
      %p15 = scmp.ge.s32.totalorder %s14, 5
      %s22 = sphi 0, %s22
      %s24 = sphi 0, %s22
      %s25 = sphi 0, %s24
      %s39 = sphi 0, %s25
      %s45 = sphi 0, %s47
      %s48 = sphi 0, %s45
      %s49 = sphi 0, %s48
      %s65 = sphi 0, %s49
      %s71 = sphi 0, %s73
      %s74 = sphi 0, %s71
      %s75 = sphi 0, %s74
      %s91 = sphi 0, %s75
      %s95 = sphi 0, %s95
      %s97 = sphi 0, %s95
      %s98 = sphi 0, %s97
      %s112 = sphi 0, %s98
    $region4: #{tpu_custom_call.1} parent=1 // loop_header_branch
      %17 = sbr.rel (%p15) target = $region8
    $region5: #{tpu_custom_call.1} parent=1 // loop_body
      %s19 = ssub.s32 %s14, 1
      %s20 = ssub.s32 %s14, 2
      %s21 = sadd.s32 %s14, 1
      %s23 = sadd.s32 %s22, 1
      %p26 = scmp.eq.s32.totalorder %s14, 2
      %p27 = scmp.ne.s32.totalorder %s22, %s24
      %p28 = scmp.eq.s32.totalorder %s14, 0
      %p29 = por %p27, %p28
      %p30 = scmp.ne.s32.totalorder %s22, %s24
      %p31 = scmp.eq.s32.totalorder %s19, 2
      %p32 = por %p30, %p31
      %p33 = scmp.ne.s32.totalorder %s24, %s25
      %p34 = scmp.eq.s32.totalorder %s19, 0
      %p35 = por %p33, %p34
      %p36 = scmp.ne.s32.totalorder %s24, %s25
      %p37 = scmp.eq.s32.totalorder %s20, 2
      %p38 = por %p36, %p37
      %p40 = scmp.ne.s32.totalorder %s25, %s39
      %p41 = scmp.eq.s32.totalorder %s20, 0
      %p42 = por %p40, %p41
      %s43 = ssub.s32 %s14, %s21
      %p44 = scmp.eq.s32.totalorder %s43, 0
      %s46 = sadd.s32 %s45, 1
      %s47 = scalar_select %p44, %s45, %s46
      %p50 = pneg %p44
      %p51 = scmp.eq.s32.totalorder %s14, 2
      %p52 = por %p50, %p51
      %p53 = scmp.ne.s32.totalorder %s45, %s48
      %p54 = scmp.eq.s32.totalorder %s14, 0
      %p55 = por %p53, %p54
      %p56 = scmp.ne.s32.totalorder %s45, %s48
      %p57 = scmp.eq.s32.totalorder %s19, 2
      %p58 = por %p56, %p57
      %p59 = scmp.ne.s32.totalorder %s48, %s49
      %p60 = scmp.eq.s32.totalorder %s19, 0
      %p61 = por %p59, %p60
      %p62 = scmp.ne.s32.totalorder %s48, %s49
      %p63 = scmp.eq.s32.totalorder %s20, 2
      %p64 = por %p62, %p63
      %p66 = scmp.ne.s32.totalorder %s49, %s65
      %p67 = scmp.eq.s32.totalorder %s20, 0
      %p68 = por %p66, %p67
      %s69 = ssub.s32 %s14, %s21
      %p70 = scmp.eq.s32.totalorder %s69, 0
      %s72 = sadd.s32 %s71, 1
      %s73 = scalar_select %p70, %s71, %s72
      %p76 = pneg %p70
      %p77 = scmp.eq.s32.totalorder %s14, 2
      %p78 = por %p76, %p77
      %p79 = scmp.ne.s32.totalorder %s71, %s74
      %p80 = scmp.eq.s32.totalorder %s14, 0
      %p81 = por %p79, %p80
      %p82 = scmp.ne.s32.totalorder %s71, %s74
      %p83 = scmp.eq.s32.totalorder %s19, 2
      %p84 = por %p82, %p83
      %p85 = scmp.ne.s32.totalorder %s74, %s75
      %p86 = scmp.eq.s32.totalorder %s19, 0
      %p87 = por %p85, %p86
      %p88 = scmp.ne.s32.totalorder %s74, %s75
      %p89 = scmp.eq.s32.totalorder %s20, 2
      %p90 = por %p88, %p89
      %p92 = scmp.ne.s32.totalorder %s75, %s91
      %p93 = scmp.eq.s32.totalorder %s20, 0
      %p94 = por %p92, %p93
      %s96 = sadd.s32 %s95, 1
      %p99 = scmp.eq.s32.totalorder %s14, 2
      %p100 = scmp.ne.s32.totalorder %s95, %s97
      %p101 = scmp.eq.s32.totalorder %s14, 0
      %p102 = por %p100, %p101
      %p103 = scmp.ne.s32.totalorder %s95, %s97
      %p104 = scmp.eq.s32.totalorder %s19, 2
      %p105 = por %p103, %p104
      %p106 = scmp.ne.s32.totalorder %s97, %s98
      %p107 = scmp.eq.s32.totalorder %s19, 0
      %p108 = por %p106, %p107
      %p109 = scmp.ne.s32.totalorder %s97, %s98
      %p110 = scmp.eq.s32.totalorder %s20, 2
      %p111 = por %p109, %p110
      %p113 = scmp.ne.s32.totalorder %s98, %s112
      %p114 = scmp.eq.s32.totalorder %s20, 0
      %p115 = por %p113, %p114
      %p116 = scmp.le.s32.totalorder 1, %s14
      %p117 = scmp.lt.s32.totalorder %s14, 4
      %p118 = pnand %p116, %p117
      %p119 = pneg %p118
      // Predicated region
      $region9: #{tpu_custom_call.1} parent=5 // pred_check
        _
      $region10: #{tpu_custom_call.1} parent=5 // pred_check_branch
        %121 = sbr.rel (%p118) target = $region12
      $region11: #{tpu_custom_call.1} parent=5 // pred_region
        %s122 = ssub.s32 %s14, 1
        // Predicated region
        $region13: #{tpu_custom_call.1} parent=11 // pred_check
          %p123 = pneg %p35
        $region14: #{tpu_custom_call.1} parent=11 // pred_check_branch
          %125 = sbr.rel (%p123) target = $region16
        $region15: #{tpu_custom_call.1} parent=11 // pred_region
          %127 = vsyncadd [#allocation6], 0
          %s129 = sshll.u32 %s0, 4
          %s130 = int_to_ptr.hbm [resolvable:$true] %s129
          %s131 = sshll.u32 [#allocation5], 4
          %s132 = int_to_ptr.vmem [resolvable:$true] %s131
          %134 = dma.hbm_to_vmem [thread:$0]  %s130, 128, %s132, [#allocation6]
        $region16: #{tpu_custom_call.1} parent=11 // pred_fallthru
          _
      $region12: #{tpu_custom_call.1} parent=5 // pred_fallthru
        _
      %p135 = scmp.lt.s32.totalorder %s14, 3
      // Predicated region
      $region17: #{tpu_custom_call.1} parent=5 // pred_check
        %p136 = pneg %p135
      $region18: #{tpu_custom_call.1} parent=5 // pred_check_branch
        %138 = sbr.rel (%p136) target = $region20
      $region19: #{tpu_custom_call.1} parent=5 // pred_region
        // Predicated region
        $region21: #{tpu_custom_call.1} parent=19 // pred_check
          %p139 = pneg %p55
        $region22: #{tpu_custom_call.1} parent=19 // pred_check_branch
          %141 = sbr.rel (%p139) target = $region24
        $region23: #{tpu_custom_call.1} parent=19 // pred_region
          %s142 = sand.u32 %s14, 1
          %s143 = scalar_lea.sflag [#allocation9], %s142
          %s144 = sand.u32 %s45, 1
          %s145 = smul.addr %s144, 128
          %s146 = scalar_lea.vmem [#allocation8], %s145
          %s147 = smul.u32 16, %s14
          %149 = vsyncadd %s143, 0
          %s150 = smul.addr %s147, 8
          %s151 = scalar_lea.hbm %s1, %s150
          %s152 = sshll.u32 %s151, 4
          %s153 = int_to_ptr.hbm [resolvable:$true] %s152
          %s154 = sshll.u32 %s146, 4
          %s155 = int_to_ptr.vmem [resolvable:$true] %s154
          %160 = dma.hbm_to_vmem [thread:$0]  %s153, 2048, %s155, %s143, 128, 128, 8
        $region24: #{tpu_custom_call.1} parent=19 // pred_fallthru
          _
        // Predicated region
        $region25: #{tpu_custom_call.1} parent=19 // pred_check
          %p161 = pneg %p81
        $region26: #{tpu_custom_call.1} parent=19 // pred_check_branch
          %163 = sbr.rel (%p161) target = $region28
        $region27: #{tpu_custom_call.1} parent=19 // pred_region
          %s164 = sand.u32 %s14, 1
          %s165 = scalar_lea.sflag [#allocation9], %s164
          %s166 = sand.u32 %s71, 1
          %s167 = smul.addr %s166, 128
          %s168 = scalar_lea.vmem [#allocation10], %s167
          %s169 = smul.u32 16, %s14
          %171 = vsyncadd %s165, 0
          %s172 = smul.addr %s169, 8
          %s173 = scalar_lea.hbm %s2, %s172
          %s174 = sshll.u32 %s173, 4
          %s175 = int_to_ptr.hbm [resolvable:$true] %s174
          %s176 = sshll.u32 %s168, 4
          %s177 = int_to_ptr.vmem [resolvable:$true] %s176
          %182 = dma.hbm_to_vmem [thread:$0]  %s175, 2048, %s177, %s165, 128, 128, 8
        $region28: #{tpu_custom_call.1} parent=19 // pred_fallthru
          _
      $region20: #{tpu_custom_call.1} parent=5 // pred_fallthru
        _
      %p183 = scmp.le.s32.totalorder 1, %s14
      %p184 = scmp.lt.s32.totalorder %s14, 4
      %p185 = pnand %p183, %p184
      %p186 = pneg %p185
      // Predicated region
      $region29: #{tpu_custom_call.1} parent=5 // pred_check
        _
      $region30: #{tpu_custom_call.1} parent=5 // pred_check_branch
        %188 = sbr.rel (%p185) target = $region32
      $region31: #{tpu_custom_call.1} parent=5 // pred_region
        %s189 = ssub.s32 %s14, 1
        // Predicated region
        $region33: #{tpu_custom_call.1} parent=31 // pred_check
          %p190 = pneg %p35
        $region34: #{tpu_custom_call.1} parent=31 // pred_check_branch
          %192 = sbr.rel (%p190) target = $region36
        $region35: #{tpu_custom_call.1} parent=31 // pred_region
          %194 = dma.done [#allocation6], 128
        $region36: #{tpu_custom_call.1} parent=31 // pred_fallthru
          _
        %s195 = sand.u32 %s19, 1
        %s196 = scalar_lea.sflag [#allocation9], %s195
        %s197 = sand.u32 %s48, 1
        %s198 = smul.addr %s197, 128
        %s199 = scalar_lea.vmem [#allocation8], %s198
        // Predicated region
        $region37: #{tpu_custom_call.1} parent=31 // pred_check
          %p200 = pneg %p61
        $region38: #{tpu_custom_call.1} parent=31 // pred_check_branch
          %202 = sbr.rel (%p200) target = $region40
        $region39: #{tpu_custom_call.1} parent=31 // pred_region
          %204 = dma.done %s196, 2048
        $region40: #{tpu_custom_call.1} parent=31 // pred_fallthru
          _
        %s205 = sand.u32 %s19, 1
        %s206 = scalar_lea.sflag [#allocation9], %s205
        %s207 = sand.u32 %s74, 1
        %s208 = smul.addr %s207, 128
        %s209 = scalar_lea.vmem [#allocation10], %s208
        // Predicated region
        $region41: #{tpu_custom_call.1} parent=31 // pred_check
          %p210 = pneg %p87
        $region42: #{tpu_custom_call.1} parent=31 // pred_check_branch
          %212 = sbr.rel (%p210) target = $region44
        $region43: #{tpu_custom_call.1} parent=31 // pred_region
          %214 = dma.done %s206, 2048
        $region44: #{tpu_custom_call.1} parent=31 // pred_fallthru
          _
        %p215 = pneg %p35
        %p216 = pneg %p32
        %s217 = sand.u32 %s19, 1
        %s218 = scalar_lea.sflag [#allocation9], %s217
        %s219 = sand.u32 %s48, 1
        %s220 = smul.addr %s219, 128
        %s221 = scalar_lea.vmem [#allocation8], %s220
        %p222 = pneg %p61
        %p223 = pneg %p58
        %s224 = sand.u32 %s19, 1
        %s225 = scalar_lea.sflag [#allocation9], %s224
        %s226 = sand.u32 %s74, 1
        %s227 = smul.addr %s226, 128
        %s228 = scalar_lea.vmem [#allocation10], %s227
        %p229 = pneg %p87
        %p230 = pneg %p84
        %p231 = pneg %p108
        %p232 = pneg %p105
        %s233 = smul.u32 16, %s19
        %s234 = smul.u32 16, %s19
        %p235 = scmp.eq.s32.totalorder %s19, 0
        // Predicated region
        $region45: #{tpu_custom_call.1} parent=31 // pred_check
          %p236 = pneg %p235
        $region46: #{tpu_custom_call.1} parent=31 // pred_check_branch
          %238 = sbr.rel (%p236) target = $region48
        $region47: #{tpu_custom_call.1} parent=31 // pred_region
          %vm239 = vcmask 7168
          %240 = vst.msk [vmem:[#allocation2] sm:$0xff] %vm239, -inf
          %241 = vst.msk [vmem:[#allocation3] sm:$0xff] %vm239, 0.0
          %242 = vst [vmem:[#allocation4] sm:$0xff] 0.0
        $region48: #{tpu_custom_call.1} parent=31 // pred_fallthru
          _
        %v243 = vld [vmem:[#allocation5] sm:$0xff]
        %v244 = vld [vmem:[%s199] sm:$0xff]
        %v245 = vld [vmem:[%s199 + $0x8] sm:$0xff]
        %v246 = vld [vmem:[%s199 + $0x10] sm:$0xff]
        %v247 = vld [vmem:[%s199 + $0x18] sm:$0xff]
        %v248 = vld [vmem:[%s199 + $0x20] sm:$0xff]
        %v249 = vld [vmem:[%s199 + $0x28] sm:$0xff]
        %v250 = vld [vmem:[%s199 + $0x30] sm:$0xff]
        %v251 = vld [vmem:[%s199 + $0x38] sm:$0xff]
        %v252 = vld [vmem:[%s199 + $0x40] sm:$0xff]
        %v253 = vld [vmem:[%s199 + $0x48] sm:$0xff]
        %v254 = vld [vmem:[%s199 + $0x50] sm:$0xff]
        %v255 = vld [vmem:[%s199 + $0x58] sm:$0xff]
        %v256 = vld [vmem:[%s199 + $0x60] sm:$0xff]
        %v257 = vld [vmem:[%s199 + $0x68] sm:$0xff]
        %v258 = vld [vmem:[%s199 + $0x70] sm:$0xff]
        %v259 = vld [vmem:[%s199 + $0x78] sm:$0xff]
        %260 = vmatpush.xpose.msra.mxu0 %v259
        %261 = vmatpush.xpose.msra.mxu0 %v258
        %262 = vmatpush.xpose.msra.mxu0 %v257
        %263 = vmatpush.xpose.msra.mxu0 %v256
        %264 = vmatpush.xpose.msra.mxu0 %v255
        %265 = vmatpush.xpose.msra.mxu0 %v254
        %266 = vmatpush.xpose.msra.mxu0 %v253
        %267 = vmatpush.xpose.msra.mxu0 %v252
        %268 = vmatpush.xpose.msra.mxu0 %v251
        %269 = vmatpush.xpose.msra.mxu0 %v250
        %270 = vmatpush.xpose.msra.mxu0 %v249
        %271 = vmatpush.xpose.msra.mxu0 %v248
        %272 = vmatpush.xpose.msra.mxu0 %v247
        %273 = vmatpush.xpose.msra.mxu0 %v246
        %274 = vmatpush.xpose.msra.mxu0 %v245
        %275 = vmatpush.xpose.msra.mxu0 %v244
        %276 = vmatmul.f32.gmra.mxu0 %v243
        %v277 = vpop.f32.mrf.mxu0
        %v278 = vadd.f32 0.0, %v277
        %279 = vdwg.mxu0
        %v280 = vlaneseq
        %v281 = vand.u32 %v280, 127
        %s282 = smul.u32 %s19, 128
        %v283 = vstv %s282
        %v284 = vadd.s32 %v281, %v283
        %vm285 = vcmp.lt.s32.totalorder %v284, 300
        %v286 = vsel %vm285, %v278, -1e+30
        %v287 = vld [vmem:[#allocation2] sm:$0xff]
        %288 = vmax.xlane.f32.xlu0 %v286
        %v289 = vpop.xlane.xlu0 %288
        %v290 = vmax.f32 %v287, %v289
        %v291 = vsub.f32 %v287, %v290
        %v292 = vmul.f32 %v291, 1.442695
        %v293 = vpow.pop %v292
        %295 = vset.pattern.permute.xlu0 0
        %296 = vperm.xlu0 %295, %v290
        %v297 = vpop.permute.xlu0 %296
        %v299 = vsub.f32 %v286, %v297
        %v300 = vmul.f32 %v299, 1.442695
        %v301 = vpow.pop %v300
        %v302 = vld [vmem:[#allocation3] sm:$0xff]
        %v303 = vmul.f32 %v293, %v302
        %304 = vadd.xlane.f32.xlu0 %v301
        %v305 = vpop.xlane.xlu0 %304
        %v306 = vadd.f32 %v303, %v305
        %vm307 = vcmask 7168
        %308 = vst.msk [vmem:[#allocation3] sm:$0xff] %vm307, %v306
        %v309 = vld [vmem:[#allocation4] sm:$0xff]
        %311 = vset.pattern.permute.xlu0 0
        %312 = vperm.xlu0 %311, %v293
        %v313 = vpop.permute.xlu0 %312
        %v315 = vmul.f32 %v313, %v309
        %v316 = vld [vmem:[%s209] sm:$0xff]
        %v317 = vld [vmem:[%s209 + $0x8] sm:$0xff]
        %v318 = vld [vmem:[%s209 + $0x10] sm:$0xff]
        %v319 = vld [vmem:[%s209 + $0x18] sm:$0xff]
        %v320 = vld [vmem:[%s209 + $0x20] sm:$0xff]
        %v321 = vld [vmem:[%s209 + $0x28] sm:$0xff]
        %v322 = vld [vmem:[%s209 + $0x30] sm:$0xff]
        %v323 = vld [vmem:[%s209 + $0x38] sm:$0xff]
        %v324 = vld [vmem:[%s209 + $0x40] sm:$0xff]
        %v325 = vld [vmem:[%s209 + $0x48] sm:$0xff]
        %v326 = vld [vmem:[%s209 + $0x50] sm:$0xff]
        %v327 = vld [vmem:[%s209 + $0x58] sm:$0xff]
        %v328 = vld [vmem:[%s209 + $0x60] sm:$0xff]
        %v329 = vld [vmem:[%s209 + $0x68] sm:$0xff]
        %v330 = vld [vmem:[%s209 + $0x70] sm:$0xff]
        %v331 = vld [vmem:[%s209 + $0x78] sm:$0xff]
        %332 = vmatpush.msra.mxu0 %v331
        %333 = vmatpush.msra.mxu0 %v330
        %334 = vmatpush.msra.mxu0 %v329
        %335 = vmatpush.msra.mxu0 %v328
        %336 = vmatpush.msra.mxu0 %v327
        %337 = vmatpush.msra.mxu0 %v326
        %338 = vmatpush.msra.mxu0 %v325
        %339 = vmatpush.msra.mxu0 %v324
        %340 = vmatpush.msra.mxu0 %v323
        %341 = vmatpush.msra.mxu0 %v322
        %342 = vmatpush.msra.mxu0 %v321
        %343 = vmatpush.msra.mxu0 %v320
        %344 = vmatpush.msra.mxu0 %v319
        %345 = vmatpush.msra.mxu0 %v318
        %346 = vmatpush.msra.mxu0 %v317
        %347 = vmatpush.msra.mxu0 %v316
        %348 = vmatmul.f32.gmra.mxu0 %v301
        %v349 = vpop.f32.mrf.mxu0
        %v350 = vadd.f32 0.0, %v349
        %351 = vdwg.mxu0
        %v352 = vadd.f32 %v315, %v350
        %353 = vst [vmem:[#allocation4] sm:$0xff] %v352
        %354 = vst.msk [vmem:[#allocation2] sm:$0xff] %vm307, %v290
        %p355 = scmp.eq.s32.totalorder %s19, 2
        // Predicated region
        $region49: #{tpu_custom_call.1} parent=31 // pred_check
          %p356 = pneg %p355
        $region50: #{tpu_custom_call.1} parent=31 // pred_check_branch
          %358 = sbr.rel (%p356) target = $region52
        $region51: #{tpu_custom_call.1} parent=31 // pred_region
          %v359 = vld [vmem:[#allocation3] sm:$0xff]
          %v360 = vrcp.pop %v359
          %v361 = vmul.f32 %v359, %v360
          %v362 = vsub.f32 1.0, %v361
          %v363 = vmul.f32 %v360, %v362
          %v364 = vadd.f32 %v360, %v363
          %vm365 = vweird.f32 %v359
          %vm366 = vweird.f32 %v360
          %vm367 = vmor %vm365, %vm366
          %v368 = vsel %vm367, %v360, %v364
          %v369 = vand.u32 2147483647, %v359
          %vm370 = vcmp.eq.f32.partialorder %v369, 8.507059e+37
          %v371 = vand.u32 %v359, 2147483648
          %v372 = vor.u32 1.1754944e-38, %v371
          %v373 = vsel %vm370, %v372, %v368
          %v374 = vld [vmem:[#allocation4] sm:$0xff]
          %376 = vset.pattern.permute.xlu0 0
          %377 = vperm.xlu0 %376, %v373
          %v378 = vpop.permute.xlu0 %377
          %v380 = vmul.f32 %v374, %v378
          %381 = vst [vmem:[#allocation11] sm:$0xff] %v380
        $region52: #{tpu_custom_call.1} parent=31 // pred_fallthru
          _
        // Predicated region
        $region53: #{tpu_custom_call.1} parent=31 // pred_check
          %p382 = pneg %p105
        $region54: #{tpu_custom_call.1} parent=31 // pred_check_branch
          %384 = sbr.rel (%p382) target = $region56
        $region55: #{tpu_custom_call.1} parent=31 // pred_region
          %386 = vsyncadd [#allocation7], 0
          %s388 = sshll.u32 [#allocation11], 4
          %s389 = int_to_ptr.vmem [resolvable:$true] %s388
          %s390 = sshll.u32 %s3, 4
          %s391 = int_to_ptr.hbm [resolvable:$true] %s390
          %393 = dma.vmem_to_hbm [thread:$0]  %s389, 128, %s391, [#allocation7]
        $region56: #{tpu_custom_call.1} parent=31 // pred_fallthru
          _
        // Predicated region
        $region57: #{tpu_custom_call.1} parent=31 // pred_check
          %p394 = pneg %p105
        $region58: #{tpu_custom_call.1} parent=31 // pred_check_branch
          %396 = sbr.rel (%p394) target = $region60
        $region59: #{tpu_custom_call.1} parent=31 // pred_region
          %398 = dma.done [#allocation7], 128
        $region60: #{tpu_custom_call.1} parent=31 // pred_fallthru
          _
      $region32: #{tpu_custom_call.1} parent=5 // pred_fallthru
        _
      %p399 = scmp.le.s32.totalorder 2, %s14
      // Predicated region
      $region61: #{tpu_custom_call.1} parent=5 // pred_check
        %p400 = pneg %p399
      $region62: #{tpu_custom_call.1} parent=5 // pred_check_branch
        %402 = sbr.rel (%p400) target = $region64
      $region63: #{tpu_custom_call.1} parent=5 // pred_region
        %s403 = ssub.s32 %s14, 2
      $region64: #{tpu_custom_call.1} parent=5 // pred_fallthru
        _
    $region6: #{tpu_custom_call.1} parent=1 // loop_footer
      %s18 = sadd.s32 1, %s14
    $region7: #{tpu_custom_call.1} parent=1 // loop_footer_branch
      %13 = sbr.rel target = $region3
    $region8: #{tpu_custom_call.1} parent=1 // loop_exit
      _
    %404 = vsyncpa [#allocation6], 1
    %s405 = scalar_lea.sflag [#allocation6], 1
    %406 = vsyncpa %s405, 1
    %407 = vsyncpa [#allocation9], 1
    %s408 = scalar_lea.sflag [#allocation9], 1
    %409 = vsyncpa %s408, 1
    %410 = vsyncpa [#allocation7], 1
    %s411 = scalar_lea.sflag [#allocation7], 1
    %412 = vsyncpa %s411, 1

</llo_original>
